<compile_context>
chip_gen: v7x
topology: tpu7x:2x2x1
jax: 0.10.0
libtpu: 0.0.40
codegen_flags: <defaults>
</compile_context>

<pallas_src>
import math

import jax
import jax.numpy as jnp
from jax.experimental import pallas as pl
from jax.experimental.pallas import tpu as pltpu

HIDDEN = 256


def _round_up(v, m):
    return ((v + m - 1) // m) * m


def dqn_kernel(x_ref, w1_ref, b1_ref, w2_ref, b2_ref, w3_ref, b3_ref, o_ref):
    # fc1 + ReLU  (bf16 inputs, f32 accumulate on the MXU)
    x = x_ref[...].astype(jnp.bfloat16)
    h1 = jnp.dot(x, w1_ref[...], preferred_element_type=jnp.float32)
    h1 = jnp.maximum(h1 + b1_ref[...], 0.0)
    # fc2 + ReLU
    h2 = jnp.dot(h1.astype(jnp.bfloat16), w2_ref[...],
                 preferred_element_type=jnp.float32)
    h2 = jnp.maximum(h2 + b2_ref[...], 0.0)
    # fc3 (no activation) — narrow, unpadded output block (true action count).
    out = jnp.dot(h2.astype(jnp.bfloat16), w3_ref[...],
                  preferred_element_type=jnp.float32)
    o_ref[...] = (out + b3_ref[...]).astype(o_ref.dtype)


def dqn_forward(x, params, *, block_batch=1024, megacore_min_batch=64):
    """Fused forward pass of the DQN MLP as a single batch-tiled Pallas kernel.

    x:      (batch, input_size) float32
    params: dict with w1 (in,256) bf16, b1 (1,256) f32, w2 (256,256) bf16,
            b2 (1,256) f32, w3 (256,out) bf16, b3 (1,out) f32
    Returns (batch, out) float32 Q-values.
    """
    batch, in_size = x.shape
    out_size = params["w3"].shape[1]

    # --- grid / tile selection ------------------------------------------------
    # Enough steps that each tile is <= block_batch rows; when the whole batch
    # fits one tile but is big enough to split, force 2 steps so both v7x
    # TensorCores get work ("parallel" axis).
    n_steps = max(1, pl.cdiv(batch, block_batch))
    if n_steps == 1 and batch >= megacore_min_batch:
        n_steps = 2
    tb = _round_up(pl.cdiv(batch, n_steps), 8)      # sublane-aligned tile
    padded_batch = n_steps * tb                      # pads < 8 rows per step

    if padded_batch != batch:
        x = jnp.pad(x, ((0, padded_batch - batch), (0, 0)))

    grid = (n_steps,)

    in_specs = [
        pl.BlockSpec((tb, in_size), lambda i: (i, 0)),        # x: marches with grid
        pl.BlockSpec((in_size, HIDDEN), lambda i: (0, 0)),    # w1: VMEM-resident
        pl.BlockSpec((1, HIDDEN), lambda i: (0, 0)),          # b1
        pl.BlockSpec((HIDDEN, HIDDEN), lambda i: (0, 0)),     # w2
        pl.BlockSpec((1, HIDDEN), lambda i: (0, 0)),          # b2
        pl.BlockSpec((HIDDEN, out_size), lambda i: (0, 0)),   # w3 (unpadded)
        pl.BlockSpec((1, out_size), lambda i: (0, 0)),        # b3 (unpadded)
    ]
    out_specs = pl.BlockSpec((tb, out_size), lambda i: (i, 0))

    # --- VMEM budget derived from the real per-step footprint ------------------
    weight_bytes = (
        (in_size * HIDDEN + HIDDEN * HIDDEN + HIDDEN * out_size) * 2   # bf16 W
        + (2 * HIDDEN + out_size) * 4                                   # f32 biases
    )
    per_step_bytes = (
        weight_bytes
        + 2 * tb * in_size * 4        # x tile, double-buffered
        + 2 * tb * out_size * 4       # out tile, double-buffered
        + 2 * tb * HIDDEN * 4         # f32 h1/h2 intermediates
        + 2 * tb * HIDDEN * 2         # bf16 copies fed to the MXU
    )
    vmem_limit = int(min(max(3 * per_step_bytes + (4 << 20), 16 << 20), 48 << 20))

    # --- cost estimate (true work, not padding) --------------------------------
    flops = 2 * padded_batch * (in_size * HIDDEN + HIDDEN * HIDDEN
                                + HIDDEN * out_size)
    bytes_accessed = (padded_batch * in_size * 4
                      + weight_bytes
                      + padded_batch * out_size * 4)

    out = pl.pallas_call(
        dqn_kernel,
        out_shape=jax.ShapeDtypeStruct((padded_batch, out_size), jnp.float32),
        grid=grid,
        in_specs=in_specs,
        out_specs=out_specs,
        compiler_params=pltpu.CompilerParams(
            dimension_semantics=("parallel",),
            vmem_limit_bytes=vmem_limit,
        ),
        cost_estimate=pl.CostEstimate(
            flops=flops, transcendentals=0, bytes_accessed=bytes_accessed),
    )(x, params["w1"], params["b1"], params["w2"], params["b2"],
      params["w3"], params["b3"])

    # Strip batch padding only if any was added.
    if padded_batch != batch:
        out = out[:batch]
    return out


def init_dqn_params(key, input_size, output_size, hidden=HIDDEN):
    """Deterministic init (Kaiming-uniform-ish like PyTorch defaults).

    Weights stored as (in, out) in bf16; biases kept in f32.
    """
    ks = jax.random.split(key, 6)

    def linear(kw, kb, fan_in, fan_out):
        bound = 1.0 / math.sqrt(fan_in)
        w = jax.random.uniform(kw, (fan_in, fan_out), jnp.float32, -bound, bound)
        b = jax.random.uniform(kb, (1, fan_out), jnp.float32, -bound, bound)
        return w.astype(jnp.bfloat16), b

    w1, b1 = linear(ks[0], ks[1], input_size, hidden)
    w2, b2 = linear(ks[2], ks[3], hidden, hidden)
    w3, b3 = linear(ks[4], ks[5], hidden, output_size)
    return {"w1": w1, "b1": b1, "w2": w2, "b2": b2, "w3": w3, "b3": b3}


def dqn_reference(x, p):
    """Pure-JAX reference with the same bf16-input / f32-accumulate numerics."""
    bf, f32 = jnp.bfloat16, jnp.float32
    h1 = jnp.dot(x.astype(bf), p["w1"], preferred_element_type=f32) + p["b1"]
    h1 = jnp.maximum(h1, 0.0)
    h2 = jnp.dot(h1.astype(bf), p["w2"], preferred_element_type=f32) + p["b2"]
    h2 = jnp.maximum(h2, 0.0)
    return jnp.dot(h2.astype(bf), p["w3"], preferred_element_type=f32) + p["b3"]


if __name__ == "__main__":
    key = jax.random.PRNGKey(0)
    k_params, k_x1, k_x2 = jax.random.split(key, 3)

    input_size = 16   # small state vector for the car RL env
    output_size = 4   # number of discrete actions

    params = init_dqn_params(k_params, input_size, output_size)

    # 1) tiny per-env-step inference batch (single grid step, ragged -> padded)
    batch = 2
    x = jax.random.normal(k_x1, (batch, input_size), jnp.float32)
    out = jax.block_until_ready(dqn_forward(x, params))
    ref = dqn_reference(x, params)
    assert out.shape == (batch, output_size)
    assert jnp.allclose(out, ref, atol=1e-3, rtol=1e-3), "mismatch vs reference (batch=2)"

    # 2) training-sized batch (exercises the 2-step megacore grid path)
    batch_l = 200
    x_l = jax.random.normal(k_x2, (batch_l, input_size), jnp.float32)
    out_l = jax.block_until_ready(dqn_forward(x_l, params))
    ref_l = dqn_reference(x_l, params)
    assert out_l.shape == (batch_l, output_size)
    assert jnp.allclose(out_l, ref_l, atol=1e-3, rtol=1e-3), "mismatch vs reference (batch=200)"

    print("KERNEL_OK")
</pallas_src>

<mosaic_0001>
module attributes {stable_mosaic.version = 11 : i64} {
  func.func @dqn_kernel(%arg0: i32, %arg1: memref<8x16xf32, #tpu.memory_space<vmem>>, %arg2: memref<16x256xbf16, #tpu.memory_space<vmem>>, %arg3: memref<1x256xf32, #tpu.memory_space<vmem>>, %arg4: memref<256x256xbf16, #tpu.memory_space<vmem>>, %arg5: memref<1x256xf32, #tpu.memory_space<vmem>>, %arg6: memref<256x4xbf16, #tpu.memory_space<vmem>>, %arg7: memref<1x4xf32, #tpu.memory_space<vmem>>, %arg8: memref<8x4xf32, #tpu.memory_space<vmem>>) attributes {dimension_semantics = [#tpu.dimension_semantics<parallel>], iteration_bounds = array<i64: 1>, scalar_prefetch = 0 : i64, scratch_operands = 0 : i64, tpu.core_type = #tpu.core_type<tc>, window_params = [{transform_indices = @transform_0, window_bounds = array<i64: 8, 16>}, {pipeline_mode = #tpu.pipeline_mode<synchronous>, transform_indices = @transform_1, window_bounds = array<i64: 16, 256>}, {pipeline_mode = #tpu.pipeline_mode<synchronous>, transform_indices = @transform_2, window_bounds = array<i64: 1, 256>}, {pipeline_mode = #tpu.pipeline_mode<synchronous>, transform_indices = @transform_3, window_bounds = array<i64: 256, 256>}, {pipeline_mode = #tpu.pipeline_mode<synchronous>, transform_indices = @transform_4, window_bounds = array<i64: 1, 256>}, {pipeline_mode = #tpu.pipeline_mode<synchronous>, transform_indices = @transform_5, window_bounds = array<i64: 256, 4>}, {pipeline_mode = #tpu.pipeline_mode<synchronous>, transform_indices = @transform_6, window_bounds = array<i64: 1, 4>}, {transform_indices = @transform_7, window_bounds = array<i64: 8, 4>}]} {
    %c0 = arith.constant 0 : index
    %c0_0 = arith.constant 0 : index
    %0 = vector.load %arg1[%c0, %c0_0] : memref<8x16xf32, #tpu.memory_space<vmem>>, vector<8x16xf32>
    %1 = arith.truncf %0 : vector<8x16xf32> to vector<8x16xbf16>
    %c0_1 = arith.constant 0 : index
    %c0_2 = arith.constant 0 : index
    %2 = vector.load %arg2[%c0_1, %c0_2] : memref<16x256xbf16, #tpu.memory_space<vmem>>, vector<16x256xbf16>
    %cst = arith.constant dense<0.000000e+00> : vector<8x256xf32>
    %3 = tpu.matmul %1, %2, %cst {dimension_numbers = #tpu.dot_dimension_numbers<[1], [0], [0], [1], [0, 0, 1, 1], [], []>} : vector<8x16xbf16>, vector<16x256xbf16>, vector<8x256xf32> -> vector<8x256xf32>
    %c0_3 = arith.constant 0 : index
    %c0_4 = arith.constant 0 : index
    %4 = vector.load %arg3[%c0_3, %c0_4] : memref<1x256xf32, #tpu.memory_space<vmem>>, vector<1x256xf32>
    %5 = vector.broadcast %4 : vector<1x256xf32> to vector<8x256xf32>
    %6 = arith.addf %3, %5 : vector<8x256xf32>
    %cst_5 = arith.constant 0.000000e+00 : f32
    %7 = vector.broadcast %cst_5 : f32 to vector<8x256xf32>
    %8 = arith.maximumf %6, %7 : vector<8x256xf32>
    %9 = arith.truncf %8 : vector<8x256xf32> to vector<8x256xbf16>
    %c0_6 = arith.constant 0 : index
    %c0_7 = arith.constant 0 : index
    %10 = vector.load %arg4[%c0_6, %c0_7] : memref<256x256xbf16, #tpu.memory_space<vmem>>, vector<256x256xbf16>
    %cst_8 = arith.constant dense<0.000000e+00> : vector<8x256xf32>
    %11 = tpu.matmul %9, %10, %cst_8 {dimension_numbers = #tpu.dot_dimension_numbers<[1], [0], [0], [1], [0, 0, 1, 1], [], []>} : vector<8x256xbf16>, vector<256x256xbf16>, vector<8x256xf32> -> vector<8x256xf32>
    %c0_9 = arith.constant 0 : index
    %c0_10 = arith.constant 0 : index
    %12 = vector.load %arg5[%c0_9, %c0_10] : memref<1x256xf32, #tpu.memory_space<vmem>>, vector<1x256xf32>
    %13 = vector.broadcast %12 : vector<1x256xf32> to vector<8x256xf32>
    %14 = arith.addf %11, %13 : vector<8x256xf32>
    %cst_11 = arith.constant 0.000000e+00 : f32
    %15 = vector.broadcast %cst_11 : f32 to vector<8x256xf32>
    %16 = arith.maximumf %14, %15 : vector<8x256xf32>
    %17 = arith.truncf %16 : vector<8x256xf32> to vector<8x256xbf16>
    %c0_12 = arith.constant 0 : index
    %c0_13 = arith.constant 0 : index
    %18 = vector.load %arg6[%c0_12, %c0_13] : memref<256x4xbf16, #tpu.memory_space<vmem>>, vector<256x4xbf16>
    %cst_14 = arith.constant dense<0.000000e+00> : vector<8x4xf32>
    %19 = tpu.matmul %17, %18, %cst_14 {dimension_numbers = #tpu.dot_dimension_numbers<[1], [0], [0], [1], [0, 0, 1, 1], [], []>} : vector<8x256xbf16>, vector<256x4xbf16>, vector<8x4xf32> -> vector<8x4xf32>
    %c0_15 = arith.constant 0 : index
    %c0_16 = arith.constant 0 : index
    %20 = vector.load %arg7[%c0_15, %c0_16] : memref<1x4xf32, #tpu.memory_space<vmem>>, vector<1x4xf32>
    %21 = vector.broadcast %20 : vector<1x4xf32> to vector<8x4xf32>
    %22 = arith.addf %19, %21 : vector<8x4xf32>
    %c0_17 = arith.constant 0 : index
    %c0_18 = arith.constant 0 : index
    %23 = vector.load %arg8[%c0_17, %c0_18] : memref<8x4xf32, #tpu.memory_space<vmem>>, vector<8x4xf32>
    tpu.vector_store %arg8[%c0_17, %c0_18], %22 {strides = array<i32>} : memref<8x4xf32, #tpu.memory_space<vmem>>, vector<8x4xf32>,
    return
  }
  func.func @transform_0(%arg0: i32) -> (i32, i32) {
    %c0_i32 = arith.constant 0 : i32
    %c0_i32_0 = arith.constant 0 : i32
    return %arg0, %c0_i32 : i32, i32
  }
  func.func @transform_1(%arg0: i32) -> (i32, i32) {
    %c0_i32 = arith.constant 0 : i32
    %c0_i32_0 = arith.constant 0 : i32
    %c0_i32_1 = arith.constant 0 : i32
    return %c0_i32, %c0_i32_0 : i32, i32
  }
  func.func @transform_2(%arg0: i32) -> (i32, i32) {
    %c0_i32 = arith.constant 0 : i32
    %c0_i32_0 = arith.constant 0 : i32
    %c0_i32_1 = arith.constant 0 : i32
    return %c0_i32, %c0_i32_0 : i32, i32
  }
  func.func @transform_3(%arg0: i32) -> (i32, i32) {
    %c0_i32 = arith.constant 0 : i32
    %c0_i32_0 = arith.constant 0 : i32
    %c0_i32_1 = arith.constant 0 : i32
    return %c0_i32, %c0_i32_0 : i32, i32
  }
  func.func @transform_4(%arg0: i32) -> (i32, i32) {
    %c0_i32 = arith.constant 0 : i32
    %c0_i32_0 = arith.constant 0 : i32
    %c0_i32_1 = arith.constant 0 : i32
    return %c0_i32, %c0_i32_0 : i32, i32
  }
  func.func @transform_5(%arg0: i32) -> (i32, i32) {
    %c0_i32 = arith.constant 0 : i32
    %c0_i32_0 = arith.constant 0 : i32
    %c0_i32_1 = arith.constant 0 : i32
    return %c0_i32, %c0_i32_0 : i32, i32
  }
  func.func @transform_6(%arg0: i32) -> (i32, i32) {
    %c0_i32 = arith.constant 0 : i32
    %c0_i32_0 = arith.constant 0 : i32
    %c0_i32_1 = arith.constant 0 : i32
    return %c0_i32, %c0_i32_0 : i32, i32
  }
  func.func @transform_7(%arg0: i32) -> (i32, i32) {
    %c0_i32 = arith.constant 0 : i32
    %c0_i32_0 = arith.constant 0 : i32
    return %arg0, %c0_i32 : i32, i32
  }
}

</mosaic_0001>

<llo_original>
// kernel: tpu_custom_call.1
$region0: #{tpu_custom_call.1}
  #allocation0 [shape = 'u32[]', space=smem, size = 0x4, offset = 0x4, fixed_abs, tag = 'smem constant byte address 0x4 - core index']
  #allocation1 [shape = 'u32[144,128]{1,0:T(1,128)}', space=vmem, size = 0x12000, scoped, tag = 'internal scratch']
  %s0 = inlined_call_operand.vmem [shape: f32[8,16], index: 0, kind: input, shape index: {}]
  %s1 = inlined_call_operand.vmem [shape: bf16[16,256], index: 1, kind: input, shape index: {}]
  %s2 = inlined_call_operand.vmem [shape: f32[1,256], index: 2, kind: input, shape index: {}]
  %s3 = inlined_call_operand.hbm [shape: bf16[256,256], index: 3, kind: input, shape index: {}]
  %s4 = inlined_call_operand.vmem [shape: f32[1,256], index: 4, kind: input, shape index: {}]
  %s5 = inlined_call_operand.vmem [shape: bf16[256,4], index: 5, kind: input, shape index: {}]
  %s6 = inlined_call_operand.vmem [shape: f32[1,4], index: 6, kind: input, shape index: {}]
  %s7 = inlined_call_operand.vmem [shape: f32[8,4], index: 7, kind: output, shape index: {}]
  %s8 = sld [smem:[#allocation0]]
  $region42: #{tpu_custom_call.1} parent=0
    _
  %s10 = ssub.s32 1, %s8
  %s11 = scalar_select 0, %s10, %s8
  $region1: #{tpu_custom_call.1} parent=0
    #allocation2 [shape = 'u8[131072]{0}', space=vmem, size = 0x20000, scoped, tag = 'input window, operand 3, single buffered']
    #allocation3 [shape = 's32[1]{0}', space=sflag, size = 0x4, scoped, tag = 'scoped memory for tpu_custom_call.1']
    %12 = vsyncpa [#allocation3], 0
    // Predicated region
    $region2: #{tpu_custom_call.1} parent=1 // pred_check
      _
    $region3: #{tpu_custom_call.1} parent=1 // pred_check_branch
      %14 = sbr.rel (0) target = $region5
    $region4: #{tpu_custom_call.1} parent=1 // pred_region
      _
    $region5: #{tpu_custom_call.1} parent=1 // pred_fallthru
      _
    // Predicated region
    $region6: #{tpu_custom_call.1} parent=1 // pred_check
      _
    $region7: #{tpu_custom_call.1} parent=1 // pred_check_branch
      %16 = sbr.rel (0) target = $region9
    $region8: #{tpu_custom_call.1} parent=1 // pred_region
      _
    $region9: #{tpu_custom_call.1} parent=1 // pred_fallthru
      _
    // Predicated region
    $region10: #{tpu_custom_call.1} parent=1 // pred_check
      _
    $region11: #{tpu_custom_call.1} parent=1 // pred_check_branch
      %18 = sbr.rel (0) target = $region13
    $region12: #{tpu_custom_call.1} parent=1 // pred_region
      _
    $region13: #{tpu_custom_call.1} parent=1 // pred_fallthru
      _
    // Predicated region
    $region14: #{tpu_custom_call.1} parent=1 // pred_check
      _
    $region15: #{tpu_custom_call.1} parent=1 // pred_check_branch
      %20 = sbr.rel (0) target = $region17
    $region16: #{tpu_custom_call.1} parent=1 // pred_region
      %s22 = ssub.s32 4096, 4096
      %23 = vsyncadd [#allocation3], %s22
      %s24 = sshll.u32 [#allocation2], 4
      %s25 = int_to_ptr.vmem [resolvable:$true] %s24
      %30 = dma.hbm_to_vmem [thread:$0]  %s3, 4096, %s25, [#allocation3], 128, 128, 8
    $region17: #{tpu_custom_call.1} parent=1 // pred_fallthru
      _
    // Predicated region
    $region18: #{tpu_custom_call.1} parent=1 // pred_check
      _
    $region19: #{tpu_custom_call.1} parent=1 // pred_check_branch
      %32 = sbr.rel (0) target = $region21
    $region20: #{tpu_custom_call.1} parent=1 // pred_region
      _
    $region21: #{tpu_custom_call.1} parent=1 // pred_fallthru
      _
    // Predicated region
    $region22: #{tpu_custom_call.1} parent=1 // pred_check
      _
    $region23: #{tpu_custom_call.1} parent=1 // pred_check_branch
      %34 = sbr.rel (0) target = $region25
    $region24: #{tpu_custom_call.1} parent=1 // pred_region
      _
    $region25: #{tpu_custom_call.1} parent=1 // pred_fallthru
      _
    // Predicated region
    $region26: #{tpu_custom_call.1} parent=1 // pred_check
      _
    $region27: #{tpu_custom_call.1} parent=1 // pred_check_branch
      %36 = sbr.rel (0) target = $region29
    $region28: #{tpu_custom_call.1} parent=1 // pred_region
      _
    $region29: #{tpu_custom_call.1} parent=1 // pred_fallthru
      _
    // Predicated region
    $region30: #{tpu_custom_call.1} parent=1 // pred_check
      _
    $region31: #{tpu_custom_call.1} parent=1 // pred_check_branch
      %38 = sbr.rel (0) target = $region33
    $region32: #{tpu_custom_call.1} parent=1 // pred_region
      %39 = dma.done [#allocation3], 4096
    $region33: #{tpu_custom_call.1} parent=1 // pred_fallthru
      _
    %v41 = vld [vmem:[%s0] sm:$0xff]
    %v42 = vpack.c.bf16 %v41, %v41
    %v43 = vld [vmem:[%s1] sm:$0xff]
    %v44 = vld [vmem:[%s1 + $0x8] sm:$0xff]
    %v45 = vld [vmem:[%s2] sm:$0x3]
    %v47 = vlaneseq
    %v48 = vshrl.u32 %v47, 7
    %v49 = vsub.s32 0, %v48
    %v50 = vrot.slane %v45, %v49
    %v51 = vlaneseq
    %v52 = vshrl.u32 %v51, 7
    %v53 = vsub.s32 1, %v52
    %v54 = vrot.slane %v45, %v53
    %v59 = vunpack.c.l.b16 %v43
    %v60 = vunpack.c.h.b16 %v43
    %v61 = vunpack.c.l.b16 %v44
    %v62 = vunpack.c.h.b16 %v44
    %v63 = vpack.c.b16 %v61, %v59
    %v64 = vpack.c.b16 %v62, %v60
    %vm67 = vcmask 130048
    %v69 = vsel %vm67, %v42, 0
    %71 = vmatprep.subr.bf16.mxu0 %v64
    %72 = vmatpush1.bf16.msra.mxu0 %v63
    %73 = vmatprep.subr.bf16.mxu0 0
    %74 = vmatpush1.bf16.msra.mxu0 0
    %75 = vmatprep.subr.bf16.mxu0 0
    %76 = vmatpush1.bf16.msra.mxu0 0
    %77 = vmatprep.subr.bf16.mxu0 0
    %78 = vmatpush1.bf16.msra.mxu0 0
    %79 = vmatprep.subr.bf16.mxu0 0
    %80 = vmatpush1.bf16.msra.mxu0 0
    %81 = vmatprep.subr.bf16.mxu0 0
    %82 = vmatpush1.bf16.msra.mxu0 0
    %83 = vmatprep.subr.bf16.mxu0 0
    %84 = vmatpush1.bf16.msra.mxu0 0
    %85 = vmatprep.subr.bf16.mxu0 0
    %86 = vmatpush1.bf16.msra.mxu0 0
    %87 = vmatprep.subr.bf16.mxu0 0
    %88 = vmatpush1.bf16.msra.mxu0 0
    %89 = vmatprep.subr.bf16.mxu0 0
    %90 = vmatpush1.bf16.msra.mxu0 0
    %91 = vmatprep.subr.bf16.mxu0 0
    %92 = vmatpush1.bf16.msra.mxu0 0
    %93 = vmatprep.subr.bf16.mxu0 0
    %94 = vmatpush1.bf16.msra.mxu0 0
    %95 = vmatprep.subr.bf16.mxu0 0
    %96 = vmatpush1.bf16.msra.mxu0 0
    %97 = vmatprep.subr.bf16.mxu0 0
    %98 = vmatpush1.bf16.msra.mxu0 0
    %99 = vmatprep.subr.bf16.mxu0 0
    %100 = vmatpush1.bf16.msra.mxu0 0
    %101 = vmatprep.subr.bf16.mxu0 0
    %102 = vmatpush1.bf16.msra.mxu0 0
    %103 = vmatprep.mubr.bf16.mxu0 0
    %104 = vmatmul.mubr.bf16.gmra.mrb[0].mxu0 %v69
    %v105 = vpop.f32.mrb[0].mxu0
    %v106 = vadd.f32 %v50, %v105
    %v107 = vpop.f32.mrb[0].mxu0
    %v108 = vadd.f32 %v54, %v107
    %v109 = vpop.f32.mrb[0].mxu0
    %v110 = vpop.f32.mrb[0].mxu0
    %111 = vdwg.mxu0
    %v112 = vmax.f32 %v106, 0.0
    %v113 = vmax.f32 %v108, 0.0
    %v114 = vpack.c.bf16 %v112, %v112
    %v115 = vpack.c.bf16 %v113, %v113
    %v116 = vld [vmem:[#allocation2] sm:$0xff]
    %v117 = vld [vmem:[#allocation2 + $0x8] sm:$0xff]
    %v118 = vld [vmem:[#allocation2 + $0x10] sm:$0xff]
    %v119 = vld [vmem:[#allocation2 + $0x18] sm:$0xff]
    %v120 = vld [vmem:[#allocation2 + $0x20] sm:$0xff]
    %v121 = vld [vmem:[#allocation2 + $0x28] sm:$0xff]
    %v122 = vld [vmem:[#allocation2 + $0x30] sm:$0xff]
    %v123 = vld [vmem:[#allocation2 + $0x38] sm:$0xff]
    %v124 = vld [vmem:[#allocation2 + $0x40] sm:$0xff]
    %v125 = vld [vmem:[#allocation2 + $0x48] sm:$0xff]
    %v126 = vld [vmem:[#allocation2 + $0x50] sm:$0xff]
    %v127 = vld [vmem:[#allocation2 + $0x58] sm:$0xff]
    %v128 = vld [vmem:[#allocation2 + $0x60] sm:$0xff]
    %v129 = vld [vmem:[#allocation2 + $0x68] sm:$0xff]
    %v130 = vld [vmem:[#allocation2 + $0x70] sm:$0xff]
    %v131 = vld [vmem:[#allocation2 + $0x78] sm:$0xff]
    %v132 = vld [vmem:[#allocation2 + $0x80] sm:$0xff]
    %v133 = vld [vmem:[#allocation2 + $0x88] sm:$0xff]
    %v134 = vld [vmem:[#allocation2 + $0x90] sm:$0xff]
    %v135 = vld [vmem:[#allocation2 + $0x98] sm:$0xff]
    %v136 = vld [vmem:[#allocation2 + $0xa0] sm:$0xff]
    %v137 = vld [vmem:[#allocation2 + $0xa8] sm:$0xff]
    %v138 = vld [vmem:[#allocation2 + $0xb0] sm:$0xff]
    %v139 = vld [vmem:[#allocation2 + $0xb8] sm:$0xff]
    %v140 = vld [vmem:[#allocation2 + $0xc0] sm:$0xff]
    %v141 = vld [vmem:[#allocation2 + $0xc8] sm:$0xff]
    %v142 = vld [vmem:[#allocation2 + $0xd0] sm:$0xff]
    %v143 = vld [vmem:[#allocation2 + $0xd8] sm:$0xff]
    %v144 = vld [vmem:[#allocation2 + $0xe0] sm:$0xff]
    %v145 = vld [vmem:[#allocation2 + $0xe8] sm:$0xff]
    %v146 = vld [vmem:[#allocation2 + $0xf0] sm:$0xff]
    %v147 = vld [vmem:[#allocation2 + $0xf8] sm:$0xff]
    %v148 = vld [vmem:[%s4] sm:$0x3]
    %v150 = vlaneseq
    %v151 = vshrl.u32 %v150, 7
    %v152 = vsub.s32 0, %v151
    %v153 = vrot.slane %v148, %v152
    %v154 = vlaneseq
    %v155 = vshrl.u32 %v154, 7
    %v156 = vsub.s32 1, %v155
    %v157 = vrot.slane %v148, %v156
    %v192 = vunpack.c.l.b16 %v116
    %v193 = vunpack.c.h.b16 %v116
    %v194 = vunpack.c.l.b16 %v117
    %v195 = vunpack.c.h.b16 %v117
    %v196 = vunpack.c.l.b16 %v118
    %v197 = vunpack.c.h.b16 %v118
    %v198 = vunpack.c.l.b16 %v119
    %v199 = vunpack.c.h.b16 %v119
    %v200 = vunpack.c.l.b16 %v120
    %v201 = vunpack.c.h.b16 %v120
    %v202 = vunpack.c.l.b16 %v121
    %v203 = vunpack.c.h.b16 %v121
    %v204 = vunpack.c.l.b16 %v122
    %v205 = vunpack.c.h.b16 %v122
    %v206 = vunpack.c.l.b16 %v123
    %v207 = vunpack.c.h.b16 %v123
    %v208 = vunpack.c.l.b16 %v124
    %v209 = vunpack.c.h.b16 %v124
    %v210 = vunpack.c.l.b16 %v125
    %v211 = vunpack.c.h.b16 %v125
    %v212 = vunpack.c.l.b16 %v126
    %v213 = vunpack.c.h.b16 %v126
    %v214 = vunpack.c.l.b16 %v127
    %v215 = vunpack.c.h.b16 %v127
    %v216 = vunpack.c.l.b16 %v128
    %v217 = vunpack.c.h.b16 %v128
    %v218 = vunpack.c.l.b16 %v129
    %v219 = vunpack.c.h.b16 %v129
    %v220 = vunpack.c.l.b16 %v130
    %v221 = vunpack.c.h.b16 %v130
    %v222 = vunpack.c.l.b16 %v131
    %v223 = vunpack.c.h.b16 %v131
    %v224 = vunpack.c.l.b16 %v132
    %v225 = vunpack.c.h.b16 %v132
    %v226 = vunpack.c.l.b16 %v133
    %v227 = vunpack.c.h.b16 %v133
    %v228 = vunpack.c.l.b16 %v134
    %v229 = vunpack.c.h.b16 %v134
    %v230 = vunpack.c.l.b16 %v135
    %v231 = vunpack.c.h.b16 %v135
    %v232 = vunpack.c.l.b16 %v136
    %v233 = vunpack.c.h.b16 %v136
    %v234 = vunpack.c.l.b16 %v137
    %v235 = vunpack.c.h.b16 %v137
    %v236 = vunpack.c.l.b16 %v138
    %v237 = vunpack.c.h.b16 %v138
    %v238 = vunpack.c.l.b16 %v139
    %v239 = vunpack.c.h.b16 %v139
    %v240 = vunpack.c.l.b16 %v140
    %v241 = vunpack.c.h.b16 %v140
    %v242 = vunpack.c.l.b16 %v141
    %v243 = vunpack.c.h.b16 %v141
    %v244 = vunpack.c.l.b16 %v142
    %v245 = vunpack.c.h.b16 %v142
    %v246 = vunpack.c.l.b16 %v143
    %v247 = vunpack.c.h.b16 %v143
    %v248 = vunpack.c.l.b16 %v144
    %v249 = vunpack.c.h.b16 %v144
    %v250 = vunpack.c.l.b16 %v145
    %v251 = vunpack.c.h.b16 %v145
    %v252 = vunpack.c.l.b16 %v146
    %v253 = vunpack.c.h.b16 %v146
    %v254 = vunpack.c.l.b16 %v147
    %v255 = vunpack.c.h.b16 %v147
    %v256 = vpack.c.b16 %v194, %v192
    %v257 = vpack.c.b16 %v195, %v193
    %v258 = vpack.c.b16 %v198, %v196
    %v259 = vpack.c.b16 %v199, %v197
    %v260 = vpack.c.b16 %v202, %v200
    %v261 = vpack.c.b16 %v203, %v201
    %v262 = vpack.c.b16 %v206, %v204
    %v263 = vpack.c.b16 %v207, %v205
    %v264 = vpack.c.b16 %v210, %v208
    %v265 = vpack.c.b16 %v211, %v209
    %v266 = vpack.c.b16 %v214, %v212
    %v267 = vpack.c.b16 %v215, %v213
    %v268 = vpack.c.b16 %v218, %v216
    %v269 = vpack.c.b16 %v219, %v217
    %v270 = vpack.c.b16 %v222, %v220
    %v271 = vpack.c.b16 %v223, %v221
    %v272 = vpack.c.b16 %v226, %v224
    %v273 = vpack.c.b16 %v227, %v225
    %v274 = vpack.c.b16 %v230, %v228
    %v275 = vpack.c.b16 %v231, %v229
    %v276 = vpack.c.b16 %v234, %v232
    %v277 = vpack.c.b16 %v235, %v233
    %v278 = vpack.c.b16 %v238, %v236
    %v279 = vpack.c.b16 %v239, %v237
    %v280 = vpack.c.b16 %v242, %v240
    %v281 = vpack.c.b16 %v243, %v241
    %v282 = vpack.c.b16 %v246, %v244
    %v283 = vpack.c.b16 %v247, %v245
    %v284 = vpack.c.b16 %v250, %v248
    %v285 = vpack.c.b16 %v251, %v249
    %v286 = vpack.c.b16 %v254, %v252
    %v287 = vpack.c.b16 %v255, %v253
    %320 = vmatprep.subr.bf16.mxu0 %v257
    %321 = vmatpush1.bf16.msra.mxu0 %v256
    %322 = vmatprep.subr.bf16.mxu0 %v259
    %323 = vmatpush1.bf16.msra.mxu0 %v258
    %324 = vmatprep.subr.bf16.mxu0 %v261
    %325 = vmatpush1.bf16.msra.mxu0 %v260
    %326 = vmatprep.subr.bf16.mxu0 %v263
    %327 = vmatpush1.bf16.msra.mxu0 %v262
    %328 = vmatprep.subr.bf16.mxu0 %v265
    %329 = vmatpush1.bf16.msra.mxu0 %v264
    %330 = vmatprep.subr.bf16.mxu0 %v267
    %331 = vmatpush1.bf16.msra.mxu0 %v266
    %332 = vmatprep.subr.bf16.mxu0 %v269
    %333 = vmatpush1.bf16.msra.mxu0 %v268
    %334 = vmatprep.subr.bf16.mxu0 %v271
    %335 = vmatpush1.bf16.msra.mxu0 %v270
    %336 = vmatprep.subr.bf16.mxu0 %v273
    %337 = vmatpush1.bf16.msra.mxu0 %v272
    %338 = vmatprep.subr.bf16.mxu0 %v275
    %339 = vmatpush1.bf16.msra.mxu0 %v274
    %340 = vmatprep.subr.bf16.mxu0 %v277
    %341 = vmatpush1.bf16.msra.mxu0 %v276
    %342 = vmatprep.subr.bf16.mxu0 %v279
    %343 = vmatpush1.bf16.msra.mxu0 %v278
    %344 = vmatprep.subr.bf16.mxu0 %v281
    %345 = vmatpush1.bf16.msra.mxu0 %v280
    %346 = vmatprep.subr.bf16.mxu0 %v283
    %347 = vmatpush1.bf16.msra.mxu0 %v282
    %348 = vmatprep.subr.bf16.mxu0 %v285
    %349 = vmatpush1.bf16.msra.mxu0 %v284
    %350 = vmatprep.subr.bf16.mxu0 %v287
    %351 = vmatpush1.bf16.msra.mxu0 %v286
    %352 = vmatprep.mubr.bf16.mxu0 %v115
    %353 = vmatmul.mubr.bf16.gmra.mrb[0].mxu0 %v114
    %v354 = vpop.f32.mrb[0].mxu0
    %v355 = vadd.f32 %v153, %v354
    %v356 = vpop.f32.mrb[0].mxu0
    %v357 = vadd.f32 %v157, %v356
    %v358 = vpop.f32.mrb[0].mxu0
    %v359 = vpop.f32.mrb[0].mxu0
    %360 = vdwg.mxu0
    %v361 = vmax.f32 %v355, 0.0
    %v362 = vmax.f32 %v357, 0.0
    %v363 = vpack.c.bf16 %v361, %v361
    %v364 = vpack.c.bf16 %v362, %v362
    %v365 = vld [vmem:[%s5] sm:$0xf]
    %v366 = vld [vmem:[%s5 + $0x4] sm:$0xf]
    %v367 = vld [vmem:[%s5 + $0x8] sm:$0xf]
    %v368 = vld [vmem:[%s5 + $0xc] sm:$0xf]
    %v369 = vld [vmem:[%s5 + $0x10] sm:$0xf]
    %v370 = vld [vmem:[%s5 + $0x14] sm:$0xf]
    %v371 = vld [vmem:[%s5 + $0x18] sm:$0xf]
    %v372 = vld [vmem:[%s5 + $0x1c] sm:$0xf]
    %v373 = vld [vmem:[%s5 + $0x20] sm:$0xf]
    %v374 = vld [vmem:[%s5 + $0x24] sm:$0xf]
    %v375 = vld [vmem:[%s5 + $0x28] sm:$0xf]
    %v376 = vld [vmem:[%s5 + $0x2c] sm:$0xf]
    %v377 = vld [vmem:[%s5 + $0x30] sm:$0xf]
    %v378 = vld [vmem:[%s5 + $0x34] sm:$0xf]
    %v379 = vld [vmem:[%s5 + $0x38] sm:$0xf]
    %v380 = vld [vmem:[%s5 + $0x3c] sm:$0xf]
    %v381 = vld [vmem:[%s5 + $0x40] sm:$0xf]
    %v382 = vld [vmem:[%s5 + $0x44] sm:$0xf]
    %v383 = vld [vmem:[%s5 + $0x48] sm:$0xf]
    %v384 = vld [vmem:[%s5 + $0x4c] sm:$0xf]
    %v385 = vld [vmem:[%s5 + $0x50] sm:$0xf]
    %v386 = vld [vmem:[%s5 + $0x54] sm:$0xf]
    %v387 = vld [vmem:[%s5 + $0x58] sm:$0xf]
    %v388 = vld [vmem:[%s5 + $0x5c] sm:$0xf]
    %v389 = vld [vmem:[%s5 + $0x60] sm:$0xf]
    %v390 = vld [vmem:[%s5 + $0x64] sm:$0xf]
    %v391 = vld [vmem:[%s5 + $0x68] sm:$0xf]
    %v392 = vld [vmem:[%s5 + $0x6c] sm:$0xf]
    %v393 = vld [vmem:[%s5 + $0x70] sm:$0xf]
    %v394 = vld [vmem:[%s5 + $0x74] sm:$0xf]
    %v395 = vld [vmem:[%s5 + $0x78] sm:$0xf]
    %v396 = vld [vmem:[%s5 + $0x7c] sm:$0xf]
    %v397 = vld [vmem:[%s6] sm:$0x1]
    %v399 = vlaneseq
    %v400 = vshrl.u32 %v399, 7
    %v401 = vsub.s32 0, %v400
    %v402 = vrot.slane %v397, %v401
    %v436 = vunpack.c.l.b16 %v365
    %v437 = vunpack.c.l.b16 %v366
    %v438 = vunpack.c.l.b16 %v367
    %v439 = vunpack.c.l.b16 %v368
    %v440 = vunpack.c.l.b16 %v369
    %v441 = vunpack.c.l.b16 %v370
    %v442 = vunpack.c.l.b16 %v371
    %v443 = vunpack.c.l.b16 %v372
    %v444 = vunpack.c.l.b16 %v373
    %v445 = vunpack.c.l.b16 %v374
    %v446 = vunpack.c.l.b16 %v375
    %v447 = vunpack.c.l.b16 %v376
    %v448 = vunpack.c.l.b16 %v377
    %v449 = vunpack.c.l.b16 %v378
    %v450 = vunpack.c.l.b16 %v379
    %v451 = vunpack.c.l.b16 %v380
    %v452 = vunpack.c.l.b16 %v381
    %v453 = vunpack.c.l.b16 %v382
    %v454 = vunpack.c.l.b16 %v383
    %v455 = vunpack.c.l.b16 %v384
    %v456 = vunpack.c.l.b16 %v385
    %v457 = vunpack.c.l.b16 %v386
    %v458 = vunpack.c.l.b16 %v387
    %v459 = vunpack.c.l.b16 %v388
    %v460 = vunpack.c.l.b16 %v389
    %v461 = vunpack.c.l.b16 %v390
    %v462 = vunpack.c.l.b16 %v391
    %v463 = vunpack.c.l.b16 %v392
    %v464 = vunpack.c.l.b16 %v393
    %v465 = vunpack.c.l.b16 %v394
    %v466 = vunpack.c.l.b16 %v395
    %v467 = vunpack.c.l.b16 %v396
    %v468 = vpack.c.b16 %v437, %v436
    %v469 = vpack.c.b16 %v439, %v438
    %v470 = vpack.c.b16 %v441, %v440
    %v471 = vpack.c.b16 %v443, %v442
    %v472 = vpack.c.b16 %v445, %v444
    %v473 = vpack.c.b16 %v447, %v446
    %v474 = vpack.c.b16 %v449, %v448
    %v475 = vpack.c.b16 %v451, %v450
    %v476 = vpack.c.b16 %v453, %v452
    %v477 = vpack.c.b16 %v455, %v454
    %v478 = vpack.c.b16 %v457, %v456
    %v479 = vpack.c.b16 %v459, %v458
    %v480 = vpack.c.b16 %v461, %v460
    %v481 = vpack.c.b16 %v463, %v462
    %v482 = vpack.c.b16 %v465, %v464
    %v483 = vpack.c.b16 %v467, %v466
    %500 = vmatprep.subr.bf16.mxu0 0
    %501 = vmatpush1.bf16.msra.mxu0 %v468
    %502 = vmatprep.subr.bf16.mxu0 0
    %503 = vmatpush1.bf16.msra.mxu0 %v469
    %504 = vmatprep.subr.bf16.mxu0 0
    %505 = vmatpush1.bf16.msra.mxu0 %v470
    %506 = vmatprep.subr.bf16.mxu0 0
    %507 = vmatpush1.bf16.msra.mxu0 %v471
    %508 = vmatprep.subr.bf16.mxu0 0
    %509 = vmatpush1.bf16.msra.mxu0 %v472
    %510 = vmatprep.subr.bf16.mxu0 0
    %511 = vmatpush1.bf16.msra.mxu0 %v473
    %512 = vmatprep.subr.bf16.mxu0 0
    %513 = vmatpush1.bf16.msra.mxu0 %v474
    %514 = vmatprep.subr.bf16.mxu0 0
    %515 = vmatpush1.bf16.msra.mxu0 %v475
    %516 = vmatprep.subr.bf16.mxu0 0
    %517 = vmatpush1.bf16.msra.mxu0 %v476
    %518 = vmatprep.subr.bf16.mxu0 0
    %519 = vmatpush1.bf16.msra.mxu0 %v477
    %520 = vmatprep.subr.bf16.mxu0 0
    %521 = vmatpush1.bf16.msra.mxu0 %v478
    %522 = vmatprep.subr.bf16.mxu0 0
    %523 = vmatpush1.bf16.msra.mxu0 %v479
    %524 = vmatprep.subr.bf16.mxu0 0
    %525 = vmatpush1.bf16.msra.mxu0 %v480
    %526 = vmatprep.subr.bf16.mxu0 0
    %527 = vmatpush1.bf16.msra.mxu0 %v481
    %528 = vmatprep.subr.bf16.mxu0 0
    %529 = vmatpush1.bf16.msra.mxu0 %v482
    %530 = vmatprep.subr.bf16.mxu0 0
    %531 = vmatpush1.bf16.msra.mxu0 %v483
    %532 = vmatprep.mubr.bf16.mxu0 %v364
    %533 = vmatmul.mubr.bf16.gmra.mrb[0].mxu0 %v363
    %v534 = vpop.f32.mrb[0].mxu0
    %v535 = vadd.f32 %v402, %v534
    %v536 = vpop.f32.mrb[0].mxu0
    %v537 = vpop.f32.mrb[0].mxu0
    %v538 = vpop.f32.mrb[0].mxu0
    %539 = vdwg.mxu0
    %vm540 = vcmask 31744
    %541 = vst.msk [vmem:[%s7] sm:$0xff] %vm540, %v535
    // Predicated region
    $region34: #{tpu_custom_call.1} parent=1 // pred_check
      _
    $region35: #{tpu_custom_call.1} parent=1 // pred_check_branch
      %543 = sbr.rel (0) target = $region37
    $region36: #{tpu_custom_call.1} parent=1 // pred_region
      _
    $region37: #{tpu_custom_call.1} parent=1 // pred_fallthru
      _
    // Predicated region
    $region38: #{tpu_custom_call.1} parent=1 // pred_check
      _
    $region39: #{tpu_custom_call.1} parent=1 // pred_check_branch
      %545 = sbr.rel (0) target = $region41
    $region40: #{tpu_custom_call.1} parent=1 // pred_region
      _
    $region41: #{tpu_custom_call.1} parent=1 // pred_fallthru
      _
    %546 = vsyncpa [#allocation3], 1

</llo_original>
